<compile_context>
chip_gen: v5e
topology: v5e:2x2
jax: 0.10.0
libtpu: 0.0.40
codegen_flags: <defaults>
</compile_context>

<pallas_src>
import functools

import jax
import jax.numpy as jnp
from jax import lax
from jax.experimental import pallas as pl
from jax.experimental.pallas import tpu as pltpu


def avg_model_kernel(ids_ref, lens_ref, m_ref, b1_ref, w2_ref, b2_ref, o_ref,
                     *, l1):
    # ids_ref : [Bb, L1+L2] int32 (second sequence's ids already offset by +V)
    # lens_ref: [Bb, L1+L2] f32   (valid-token masks)
    # m_ref   : [2V, Hp]    f32   (table folded into W1, lane-padded hidden)
    # b1_ref  : [1, Hp], w2_ref: [Hp, Cp], b2_ref: [1, Cp], o_ref: [Bb, Cp]
    ids = ids_ref[...]
    lens = lens_ref[...]
    Bb, L = ids.shape
    two_v = m_ref.shape[0]

    # Per-sequence normalization folded into per-token weights.
    # NOTE (contract): a row whose lens are all zero divides by a zero sum and
    # yields inf/NaN, exactly like the PyTorch module; wrapper padding rows use
    # lens=1 so they stay finite.
    inv1 = 1.0 / jnp.sum(lens[:, :l1], axis=-1, keepdims=True)      # [Bb, 1]
    inv2 = 1.0 / jnp.sum(lens[:, l1:], axis=-1, keepdims=True)      # [Bb, 1]
    lane = lax.broadcasted_iota(jnp.int32, (Bb, L), 1)
    wts = lens * jnp.where(lane < l1, inv1, inv2)                   # [Bb, L]

    # Weighted count matrix over the doubled vocab (seq1 -> [0,V), seq2 -> [V,2V)):
    #   counts[b, v] = sum_l wts[b, l] * (ids[b, l] == v)
    iota_v = lax.broadcasted_iota(jnp.int32, (Bb, L, two_v), 2)
    sel = jnp.where(ids[:, :, None] == iota_v, wts[:, :, None], 0.0)
    counts = jnp.sum(sel, axis=1)                                   # [Bb, 2V]

    # Dropout: identity at inference.
    # linear1 + ReLU: one lane-dense K=2V matmul against the folded table@W1.
    h = jnp.dot(counts, m_ref[...],
                preferred_element_type=jnp.float32) + b1_ref[...]
    h = jnp.maximum(h, 0.0)

    # linear2 (lane-padded to Cp columns -> unmasked vst).
    o_ref[...] = jnp.dot(h, w2_ref[...],
                         preferred_element_type=jnp.float32) + b2_ref[...]


def avg_model_forward(ids1, ids2, lens1, lens2, table, w1, b1, w2, b2,
                      *, b_blk=None):
    B, L1 = ids1.shape
    L2 = ids2.shape[1]
    V, D = table.shape
    H = w1.shape[1]
    C = w2.shape[1]

    # Batch block: single grid step for small B; 256-row blocks for large B
    # (per-block one-hot intermediate is ~b_blk * (L1+L2) * 2V * 4 B, well
    # inside the 32 MiB default scoped VMEM on v7x for b_blk <= 256).
    if b_blk is None:
        b_blk = pl.cdiv(B, 8) * 8 if B <= 256 else 256
    B_pad = pl.cdiv(B, b_blk) * b_blk
    pad_b = B_pad - B

    # Lane-dense paddings for the hidden layer and the classifier output.
    h_pad = pl.cdiv(H, 128) * 128
    c_pad = pl.cdiv(C, 128) * 128

    # Fold the embedding table into W1 once in XLA:
    #   concat([avg1, avg2], -1) @ W1 == counts_2V @ concat([table@W1[:D], table@W1[D:]], 0)
    m = jnp.concatenate([table @ w1[:D], table @ w1[D:]], axis=0)   # [2V, H]
    m = jnp.pad(m, ((0, 0), (0, h_pad - H)))
    b1_p = jnp.pad(b1.reshape(1, H), ((0, 0), (0, h_pad - H)))
    w2_p = jnp.pad(w2, ((0, h_pad - H), (0, c_pad - C)))
    b2_p = jnp.pad(b2.reshape(1, C), ((0, 0), (0, c_pad - C)))

    # Pack the four narrow inputs into two arrays (1 DMA each per block);
    # offset the second sequence's ids by +V to address rows [V, 2V) of m.
    ids_cat = jnp.concatenate([ids1, ids2 + V], axis=1).astype(jnp.int32)
    lens_cat = jnp.concatenate([lens1, lens2], axis=1).astype(jnp.float32)
    # Padding rows get lens=1 so their (discarded) outputs stay finite.
    ids_cat = jnp.pad(ids_cat, ((0, pad_b), (0, 0)))
    lens_cat = jnp.pad(lens_cat, ((0, pad_b), (0, 0)), constant_values=1.0)

    L = L1 + L2
    const = lambda i: (0, 0)                    # constants DMA'd once
    out = pl.pallas_call(
        functools.partial(avg_model_kernel, l1=L1),
        out_shape=jax.ShapeDtypeStruct((B_pad, c_pad), jnp.float32),
        grid_spec=pltpu.PrefetchScalarGridSpec(
            num_scalar_prefetch=0,
            grid=(B_pad // b_blk,),
            in_specs=[
                pl.BlockSpec((b_blk, L), lambda i: (i, 0)),     # ids_cat
                pl.BlockSpec((b_blk, L), lambda i: (i, 0)),     # lens_cat
                pl.BlockSpec((2 * V, h_pad), const),            # folded table@W1
                pl.BlockSpec((1, h_pad), const),                # b1
                pl.BlockSpec((h_pad, c_pad), const),            # W2
                pl.BlockSpec((1, c_pad), const),                # b2
            ],
            out_specs=pl.BlockSpec((b_blk, c_pad), lambda i: (i, 0)),
        ),
        compiler_params=pltpu.CompilerParams(
            dimension_semantics=("arbitrary",)),
    )(ids_cat, lens_cat, m, b1_p, w2_p, b2_p)
    return out[:B, :C]


def reference_forward(ids1, ids2, lens1, lens2, table, w1, b1, w2, b2):
    def avg(ids, lens):
        emb = jnp.take(table, ids, axis=0)                    # [B, L, D]
        s = jnp.sum(emb * lens[:, :, None], axis=1)
        return s / jnp.sum(lens, axis=-1)[:, None]
    x = jnp.concatenate([avg(ids1, lens1), avg(ids2, lens2)], axis=-1)
    h = jnp.maximum(x @ w1 + b1, 0.0)
    return h @ w2 + b2


if __name__ == "__main__":
    # conf: word_num=64, word_dim=16, hid_size=32, class_num=4, dropout=0.2 (eval)
    V, D, H, C = 64, 16, 32, 4
    B, L1, L2 = 12, 8, 12   # B not a multiple of 8 -> exercises batch padding

    key = jax.random.PRNGKey(0)
    k_tab, k_w1, k_b1, k_w2, k_b2, k_i1, k_i2, k_l1, k_l2 = jax.random.split(key, 9)

    # nn.init.uniform_(embed.weight, -0.01, 0.01)
    table = jax.random.uniform(k_tab, (V, D), jnp.float32, -0.01, 0.01)
    # nn.Linear default init: U(-1/sqrt(fan_in), 1/sqrt(fan_in)); stored [in, out].
    lim1 = 1.0 / jnp.sqrt(2.0 * D)
    w1 = jax.random.uniform(k_w1, (2 * D, H), jnp.float32, -lim1, lim1)
    b1 = jax.random.uniform(k_b1, (1, H), jnp.float32, -lim1, lim1)
    lim2 = 1.0 / jnp.sqrt(float(H))
    w2 = jax.random.uniform(k_w2, (H, C), jnp.float32, -lim2, lim2)
    b2 = jax.random.uniform(k_b2, (1, C), jnp.float32, -lim2, lim2)

    ids1 = jax.random.randint(k_i1, (B, L1), 0, V, jnp.int32)
    ids2 = jax.random.randint(k_i2, (B, L2), 0, V, jnp.int32)
    # Valid-token masks (arg*_lens in the PyTorch code); at least 1 valid token.
    lens1 = (jax.random.uniform(k_l1, (B, L1)) > 0.3).astype(jnp.float32)
    lens1 = lens1.at[:, 0].set(1.0)
    lens2 = (jax.random.uniform(k_l2, (B, L2)) > 0.3).astype(jnp.float32)
    lens2 = lens2.at[:, 0].set(1.0)

    out = avg_model_forward(ids1, ids2, lens1, lens2, table, w1, b1, w2, b2)
    out = jax.block_until_ready(out)

    ref = reference_forward(ids1, ids2, lens1, lens2, table, w1, b1, w2, b2)
    assert out.shape == (B, C)
    assert jnp.allclose(out, ref, atol=1e-5, rtol=1e-5)

    print("KERNEL_OK")
</pallas_src>

<mosaic_0001>
module attributes {stable_mosaic.version = 11 : i64} {
  func.func @avg_model_kernel(%arg0: i32, %arg1: memref<16x20xi32, #tpu.memory_space<vmem>>, %arg2: memref<16x20xf32, #tpu.memory_space<vmem>>, %arg3: memref<128x128xf32, #tpu.memory_space<vmem>>, %arg4: memref<1x128xf32, #tpu.memory_space<vmem>>, %arg5: memref<128x128xf32, #tpu.memory_space<vmem>>, %arg6: memref<1x128xf32, #tpu.memory_space<vmem>>, %arg7: memref<16x128xf32, #tpu.memory_space<vmem>>) attributes {dimension_semantics = [#tpu.dimension_semantics<arbitrary>], iteration_bounds = array<i64: 1>, scalar_prefetch = 0 : i64, scratch_operands = 0 : i64, tpu.core_type = #tpu.core_type<tc>, window_params = [{transform_indices = @transform_0, window_bounds = array<i64: 16, 20>}, {transform_indices = @transform_1, window_bounds = array<i64: 16, 20>}, {pipeline_mode = #tpu.pipeline_mode<synchronous>, transform_indices = @transform_2, window_bounds = array<i64: 128, 128>}, {pipeline_mode = #tpu.pipeline_mode<synchronous>, transform_indices = @transform_3, window_bounds = array<i64: 1, 128>}, {pipeline_mode = #tpu.pipeline_mode<synchronous>, transform_indices = @transform_4, window_bounds = array<i64: 128, 128>}, {pipeline_mode = #tpu.pipeline_mode<synchronous>, transform_indices = @transform_5, window_bounds = array<i64: 1, 128>}, {transform_indices = @transform_6, window_bounds = array<i64: 16, 128>}]} {
    %c0 = arith.constant 0 : index
    %c0_0 = arith.constant 0 : index
    %0 = vector.load %arg1[%c0, %c0_0] : memref<16x20xi32, #tpu.memory_space<vmem>>, vector<16x20xi32>
    %c0_1 = arith.constant 0 : index
    %c0_2 = arith.constant 0 : index
    %1 = vector.load %arg2[%c0_1, %c0_2] : memref<16x20xf32, #tpu.memory_space<vmem>>, vector<16x20xf32>
    %2 = vector.extract_strided_slice %1 {offsets = [0, 0], sizes = [16, 8], strides = [1, 1]} : vector<16x20xf32> to vector<16x8xf32>
    %cst = arith.constant dense<0.000000e+00> : vector<16xf32>
    %3 = vector.multi_reduction <add>, %2, %cst [1] : vector<16x8xf32> to vector<16xf32>
    %4 = vector.shape_cast %3 : vector<16xf32> to vector<16x1xf32>
    %cst_3 = arith.constant 1.000000e+00 : f32
    %5 = vector.broadcast %cst_3 : f32 to vector<16x1xf32>
    %6 = arith.divf %5, %4 : vector<16x1xf32>
    %7 = vector.extract_strided_slice %1 {offsets = [0, 8], sizes = [16, 12], strides = [1, 1]} : vector<16x20xf32> to vector<16x12xf32>
    %cst_4 = arith.constant dense<0.000000e+00> : vector<16xf32>
    %8 = vector.multi_reduction <add>, %7, %cst_4 [1] : vector<16x12xf32> to vector<16xf32>
    %9 = vector.shape_cast %8 : vector<16xf32> to vector<16x1xf32>
    %cst_5 = arith.constant 1.000000e+00 : f32
    %10 = vector.broadcast %cst_5 : f32 to vector<16x1xf32>
    %11 = arith.divf %10, %9 : vector<16x1xf32>
    %12 = tpu.iota {dimensions = array<i32: 1>} : vector<16x20xi32>
    %c8_i32 = arith.constant 8 : i32
    %13 = vector.broadcast %c8_i32 : i32 to vector<16x20xi32>
    %14 = arith.cmpi slt, %12, %13 : vector<16x20xi32>
    %15 = vector.shape_cast %6 : vector<16x1xf32> to vector<16x1xf32>
    %16 = vector.broadcast %15 : vector<16x1xf32> to vector<16x20xf32>
    %17 = vector.shape_cast %11 : vector<16x1xf32> to vector<16x1xf32>
    %18 = vector.broadcast %17 : vector<16x1xf32> to vector<16x20xf32>
    %19 = arith.select %14, %16, %18 : vector<16x20xi1>, vector<16x20xf32>
    %20 = arith.mulf %1, %19 : vector<16x20xf32>
    %21 = tpu.iota {dimensions = array<i32: 2>} : vector<16x20x128xi32>
    %22 = vector.shape_cast %0 : vector<16x20xi32> to vector<16x20x1xi32>
    %23 = vector.broadcast %22 : vector<16x20x1xi32> to vector<16x20x128xi32>
    %24 = arith.cmpi eq, %23, %21 : vector<16x20x128xi32>
    %25 = vector.shape_cast %20 : vector<16x20xf32> to vector<16x20x1xf32>
    %cst_6 = arith.constant 0.000000e+00 : f32
    %26 = vector.shape_cast %25 : vector<16x20x1xf32> to vector<16x20x1xf32>
    %27 = vector.broadcast %26 : vector<16x20x1xf32> to vector<16x20x128xf32>
    %28 = vector.broadcast %cst_6 : f32 to vector<16x20x128xf32>
    %29 = arith.select %24, %27, %28 : vector<16x20x128xi1>, vector<16x20x128xf32>
    %cst_7 = arith.constant dense<0.000000e+00> : vector<16x128xf32>
    %30 = vector.multi_reduction <add>, %29, %cst_7 [1] : vector<16x20x128xf32> to vector<16x128xf32>
    %c0_8 = arith.constant 0 : index
    %c0_9 = arith.constant 0 : index
    %31 = vector.load %arg3[%c0_8, %c0_9] : memref<128x128xf32, #tpu.memory_space<vmem>>, vector<128x128xf32>
    %cst_10 = arith.constant dense<0.000000e+00> : vector<16x128xf32>
    %32 = tpu.matmul %30, %31, %cst_10 {dimension_numbers = #tpu.dot_dimension_numbers<[1], [0], [0], [1], [0, 0, 1, 1], [], []>} : vector<16x128xf32>, vector<128x128xf32>, vector<16x128xf32> -> vector<16x128xf32>
    %c0_11 = arith.constant 0 : index
    %c0_12 = arith.constant 0 : index
    %33 = vector.load %arg4[%c0_11, %c0_12] : memref<1x128xf32, #tpu.memory_space<vmem>>, vector<1x128xf32>
    %34 = vector.broadcast %33 : vector<1x128xf32> to vector<16x128xf32>
    %35 = arith.addf %32, %34 : vector<16x128xf32>
    %cst_13 = arith.constant 0.000000e+00 : f32
    %36 = vector.broadcast %cst_13 : f32 to vector<16x128xf32>
    %37 = arith.maximumf %35, %36 : vector<16x128xf32>
    %c0_14 = arith.constant 0 : index
    %c0_15 = arith.constant 0 : index
    %38 = vector.load %arg5[%c0_14, %c0_15] : memref<128x128xf32, #tpu.memory_space<vmem>>, vector<128x128xf32>
    %cst_16 = arith.constant dense<0.000000e+00> : vector<16x128xf32>
    %39 = tpu.matmul %37, %38, %cst_16 {dimension_numbers = #tpu.dot_dimension_numbers<[1], [0], [0], [1], [0, 0, 1, 1], [], []>} : vector<16x128xf32>, vector<128x128xf32>, vector<16x128xf32> -> vector<16x128xf32>
    %c0_17 = arith.constant 0 : index
    %c0_18 = arith.constant 0 : index
    %40 = vector.load %arg6[%c0_17, %c0_18] : memref<1x128xf32, #tpu.memory_space<vmem>>, vector<1x128xf32>
    %41 = vector.broadcast %40 : vector<1x128xf32> to vector<16x128xf32>
    %42 = arith.addf %39, %41 : vector<16x128xf32>
    %c0_19 = arith.constant 0 : index
    %c0_20 = arith.constant 0 : index
    %43 = vector.load %arg7[%c0_19, %c0_20] : memref<16x128xf32, #tpu.memory_space<vmem>>, vector<16x128xf32>
    tpu.vector_store %arg7[%c0_19, %c0_20], %42 {strides = array<i32>} : memref<16x128xf32, #tpu.memory_space<vmem>>, vector<16x128xf32>,
    return
  }
  func.func @transform_0(%arg0: i32) -> (i32, i32) {
    %c0_i32 = arith.constant 0 : i32
    %c0_i32_0 = arith.constant 0 : i32
    return %arg0, %c0_i32 : i32, i32
  }
  func.func @transform_1(%arg0: i32) -> (i32, i32) {
    %c0_i32 = arith.constant 0 : i32
    %c0_i32_0 = arith.constant 0 : i32
    return %arg0, %c0_i32 : i32, i32
  }
  func.func @transform_2(%arg0: i32) -> (i32, i32) {
    %c0_i32 = arith.constant 0 : i32
    %c0_i32_0 = arith.constant 0 : i32
    %c0_i32_1 = arith.constant 0 : i32
    return %c0_i32, %c0_i32_0 : i32, i32
  }
  func.func @transform_3(%arg0: i32) -> (i32, i32) {
    %c0_i32 = arith.constant 0 : i32
    %c0_i32_0 = arith.constant 0 : i32
    %c0_i32_1 = arith.constant 0 : i32
    return %c0_i32, %c0_i32_0 : i32, i32
  }
  func.func @transform_4(%arg0: i32) -> (i32, i32) {
    %c0_i32 = arith.constant 0 : i32
    %c0_i32_0 = arith.constant 0 : i32
    %c0_i32_1 = arith.constant 0 : i32
    return %c0_i32, %c0_i32_0 : i32, i32
  }
  func.func @transform_5(%arg0: i32) -> (i32, i32) {
    %c0_i32 = arith.constant 0 : i32
    %c0_i32_0 = arith.constant 0 : i32
    %c0_i32_1 = arith.constant 0 : i32
    return %c0_i32, %c0_i32_0 : i32, i32
  }
  func.func @transform_6(%arg0: i32) -> (i32, i32) {
    %c0_i32 = arith.constant 0 : i32
    %c0_i32_0 = arith.constant 0 : i32
    return %arg0, %c0_i32 : i32, i32
  }
}

</mosaic_0001>

<llo_original>
// kernel: tpu_custom_call.1
$region0: #{tpu_custom_call.1}
  #allocation0 [shape = 'u32[]', space=smem, size = 0x4, offset = 0x4, fixed_abs, tag = 'smem constant byte address 0x4 - core index']
  #allocation1 [shape = 'u32[72,128]{1,0:T(1,128)}', space=vmem, size = 0x9000, scoped, tag = 'internal scratch']
  %s0 = inlined_call_operand.hbm [shape: s32[16,20], index: 0, kind: input, shape index: {}]
  %s1 = inlined_call_operand.hbm [shape: f32[16,20], index: 1, kind: input, shape index: {}]
  %s2 = inlined_call_operand.hbm [shape: f32[128,128], index: 2, kind: input, shape index: {}]
  %s3 = inlined_call_operand.vmem [shape: f32[1,128], index: 3, kind: input, shape index: {}]
  %s4 = inlined_call_operand.hbm [shape: f32[128,128], index: 4, kind: input, shape index: {}]
  %s5 = inlined_call_operand.vmem [shape: f32[1,128], index: 5, kind: input, shape index: {}]
  %s6 = inlined_call_operand.hbm [shape: f32[16,128], index: 6, kind: output, shape index: {}]
  %s7 = sld [smem:[#allocation0]]
  $region50: #{tpu_custom_call.1} parent=0
    _
  %s9 = ssub.s32 1, %s7
  %s10 = scalar_select 0, %s9, %s7
  $region1: #{tpu_custom_call.1} parent=0
    #allocation2 [shape = 'u8[8192]{0}', space=vmem, size = 0x2000, scoped, tag = 'input window, operand 0, single buffered']
    #allocation3 [shape = 's32[1]{0}', space=sflag, size = 0x4, scoped, tag = 'scoped memory for tpu_custom_call.1']
    #allocation4 [shape = 's32[1]{0}', space=sflag, size = 0x4, scoped, tag = 'scoped memory for tpu_custom_call.1']
    #allocation5 [shape = 'u8[8192]{0}', space=vmem, size = 0x2000, scoped, tag = 'input window, operand 1, single buffered']
    #allocation6 [shape = 's32[1]{0}', space=sflag, size = 0x4, scoped, tag = 'scoped memory for tpu_custom_call.1']
    #allocation7 [shape = 'u8[65536]{0}', space=vmem, size = 0x10000, scoped, tag = 'input window, operand 2, single buffered']
    #allocation8 [shape = 'u8[65536]{0}', space=vmem, size = 0x10000, scoped, tag = 'input window, operand 4, single buffered']
    #allocation9 [shape = 's32[1]{0}', space=sflag, size = 0x4, scoped, tag = 'scoped memory for tpu_custom_call.1']
    #allocation10 [shape = 'u8[8192]{0}', space=vmem, size = 0x2000, scoped, tag = 'output window, operand 0, single buffered']
    %11 = vsyncpa [#allocation3], 0
    %12 = vsyncpa [#allocation6], 0
    %13 = vsyncpa [#allocation9], 0
    %14 = vsyncpa [#allocation4], 0
    // Predicated region
    $region2: #{tpu_custom_call.1} parent=1 // pred_check
      _
    $region3: #{tpu_custom_call.1} parent=1 // pred_check_branch
      %16 = sbr.rel (0) target = $region5
    $region4: #{tpu_custom_call.1} parent=1 // pred_region
      %18 = vsyncadd [#allocation3], 0
      %s19 = sshll.u32 %s0, 4
      %s20 = int_to_ptr.hbm [resolvable:$true] %s19
      %s21 = sshll.u32 [#allocation2], 4
      %s22 = int_to_ptr.vmem [resolvable:$true] %s21
      %27 = dma.hbm_to_vmem [thread:$0]  %s20, 256, %s22, [#allocation3], 128, 128, 8
    $region5: #{tpu_custom_call.1} parent=1 // pred_fallthru
      _
    // Predicated region
    $region6: #{tpu_custom_call.1} parent=1 // pred_check
      _
    $region7: #{tpu_custom_call.1} parent=1 // pred_check_branch
      %29 = sbr.rel (0) target = $region9
    $region8: #{tpu_custom_call.1} parent=1 // pred_region
      %31 = vsyncadd [#allocation6], 0
      %s32 = sshll.u32 %s1, 4
      %s33 = int_to_ptr.hbm [resolvable:$true] %s32
      %s34 = sshll.u32 [#allocation5], 4
      %s35 = int_to_ptr.vmem [resolvable:$true] %s34
      %40 = dma.hbm_to_vmem [thread:$0]  %s33, 256, %s35, [#allocation6], 128, 128, 8
    $region9: #{tpu_custom_call.1} parent=1 // pred_fallthru
      _
    // Predicated region
    $region10: #{tpu_custom_call.1} parent=1 // pred_check
      _
    $region11: #{tpu_custom_call.1} parent=1 // pred_check_branch
      %42 = sbr.rel (0) target = $region13
    $region12: #{tpu_custom_call.1} parent=1 // pred_region
      %44 = vsyncadd [#allocation6], 0
      %s45 = sshll.u32 %s2, 4
      %s46 = int_to_ptr.hbm [resolvable:$true] %s45
      %s47 = sshll.u32 [#allocation7], 4
      %s48 = int_to_ptr.vmem [resolvable:$true] %s47
      %53 = dma.hbm_to_vmem [thread:$0]  %s46, 2048, %s48, [#allocation6], 128, 128, 8
    $region13: #{tpu_custom_call.1} parent=1 // pred_fallthru
      _
    // Predicated region
    $region14: #{tpu_custom_call.1} parent=1 // pred_check
      _
    $region15: #{tpu_custom_call.1} parent=1 // pred_check_branch
      %55 = sbr.rel (0) target = $region17
    $region16: #{tpu_custom_call.1} parent=1 // pred_region
      _
    $region17: #{tpu_custom_call.1} parent=1 // pred_fallthru
      _
    // Predicated region
    $region18: #{tpu_custom_call.1} parent=1 // pred_check
      _
    $region19: #{tpu_custom_call.1} parent=1 // pred_check_branch
      %57 = sbr.rel (0) target = $region21
    $region20: #{tpu_custom_call.1} parent=1 // pred_region
      %59 = vsyncadd [#allocation9], 0
      %s60 = sshll.u32 %s4, 4
      %s61 = int_to_ptr.hbm [resolvable:$true] %s60
      %s62 = sshll.u32 [#allocation8], 4
      %s63 = int_to_ptr.vmem [resolvable:$true] %s62
      %68 = dma.hbm_to_vmem [thread:$0]  %s61, 2048, %s63, [#allocation9], 128, 128, 8
    $region21: #{tpu_custom_call.1} parent=1 // pred_fallthru
      _
    // Predicated region
    $region22: #{tpu_custom_call.1} parent=1 // pred_check
      _
    $region23: #{tpu_custom_call.1} parent=1 // pred_check_branch
      %70 = sbr.rel (0) target = $region25
    $region24: #{tpu_custom_call.1} parent=1 // pred_region
      _
    $region25: #{tpu_custom_call.1} parent=1 // pred_fallthru
      _
    // Predicated region
    $region26: #{tpu_custom_call.1} parent=1 // pred_check
      _
    $region27: #{tpu_custom_call.1} parent=1 // pred_check_branch
      %72 = sbr.rel (0) target = $region29
    $region28: #{tpu_custom_call.1} parent=1 // pred_region
      %74 = dma.done [#allocation3], 256
    $region29: #{tpu_custom_call.1} parent=1 // pred_fallthru
      _
    // Predicated region
    $region30: #{tpu_custom_call.1} parent=1 // pred_check
      _
    $region31: #{tpu_custom_call.1} parent=1 // pred_check_branch
      %76 = sbr.rel (0) target = $region33
    $region32: #{tpu_custom_call.1} parent=1 // pred_region
      %78 = dma.done [#allocation6], 256
    $region33: #{tpu_custom_call.1} parent=1 // pred_fallthru
      _
    // Predicated region
    $region34: #{tpu_custom_call.1} parent=1 // pred_check
      _
    $region35: #{tpu_custom_call.1} parent=1 // pred_check_branch
      %80 = sbr.rel (0) target = $region37
    $region36: #{tpu_custom_call.1} parent=1 // pred_region
      %82 = dma.done [#allocation6], 2048
    $region37: #{tpu_custom_call.1} parent=1 // pred_fallthru
      _
    // Predicated region
    $region38: #{tpu_custom_call.1} parent=1 // pred_check
      _
    $region39: #{tpu_custom_call.1} parent=1 // pred_check_branch
      %84 = sbr.rel (0) target = $region41
    $region40: #{tpu_custom_call.1} parent=1 // pred_region
      %86 = dma.done [#allocation9], 2048
    $region41: #{tpu_custom_call.1} parent=1 // pred_fallthru
      _
    %v87 = vld [vmem:[#allocation2] sm:$0xff]
    %v88 = vld [vmem:[#allocation2 + $0x8] sm:$0xff]
    %v89 = vld [vmem:[#allocation5] sm:$0xff]
    %v90 = vld [vmem:[#allocation5 + $0x8] sm:$0xff]
    %vm91 = vcmask 64512
    %v92 = vsel %vm91, %v89, 0.0
    %93 = vadd.xlane.f32.xlu0 %v92
    %v94 = vpop.xlane.xlu0 %93
    %v95 = vsel %vm91, %v90, 0.0
    %96 = vadd.xlane.f32.xlu0 %v95
    %v97 = vpop.xlane.xlu0 %96
    %v98 = vrcp.pop %v94
    %v99 = vmul.f32 %v94, %v98
    %v100 = vsub.f32 1.0, %v99
    %v101 = vmul.f32 %v98, %v100
    %v102 = vadd.f32 %v98, %v101
    %vm103 = vweird.f32 %v94
    %vm104 = vweird.f32 %v98
    %vm105 = vmor %vm103, %vm104
    %v106 = vsel %vm105, %v98, %v102
    %v107 = vand.u32 2147483647, %v94
    %vm108 = vcmp.eq.f32.partialorder %v107, 8.507059e+37
    %v109 = vand.u32 %v94, 2147483648
    %v110 = vor.u32 1.1754944e-38, %v109
    %v111 = vsel %vm108, %v110, %v106
    %v112 = vmul.f32 1.0, %v111
    %v113 = vrcp.pop %v97
    %v114 = vmul.f32 %v97, %v113
    %v115 = vsub.f32 1.0, %v114
    %v116 = vmul.f32 %v113, %v115
    %v117 = vadd.f32 %v113, %v116
    %vm118 = vweird.f32 %v97
    %vm119 = vweird.f32 %v113
    %vm120 = vmor %vm118, %vm119
    %v121 = vsel %vm120, %v113, %v117
    %v122 = vand.u32 2147483647, %v97
    %vm123 = vcmp.eq.f32.partialorder %v122, 8.507059e+37
    %v124 = vand.u32 %v97, 2147483648
    %v125 = vor.u32 1.1754944e-38, %v124
    %v126 = vsel %vm123, %v125, %v121
    %v127 = vmul.f32 1.0, %v126
    %130 = vrot.lane.b32.xlu0 %v89, 120
    %v131 = vpop.permute.xlu0 %130
    %132 = vrot.lane.b32.xlu0 %v90, 120
    %v133 = vpop.permute.xlu0 %132
    %vm136 = vcmask 97280
    %v137 = vsel %vm136, %v131, 0.0
    %138 = vadd.xlane.f32.xlu0 %v137
    %v139 = vpop.xlane.xlu0 %138
    %v140 = vsel %vm136, %v133, 0.0
    %141 = vadd.xlane.f32.xlu0 %v140
    %v142 = vpop.xlane.xlu0 %141
    %v143 = vrcp.pop %v139
    %v144 = vmul.f32 %v139, %v143
    %v145 = vsub.f32 1.0, %v144
    %v146 = vmul.f32 %v143, %v145
    %v147 = vadd.f32 %v143, %v146
    %vm148 = vweird.f32 %v139
    %vm149 = vweird.f32 %v143
    %vm150 = vmor %vm148, %vm149
    %v151 = vsel %vm150, %v143, %v147
    %v152 = vand.u32 2147483647, %v139
    %vm153 = vcmp.eq.f32.partialorder %v152, 8.507059e+37
    %v154 = vand.u32 %v139, 2147483648
    %v155 = vor.u32 1.1754944e-38, %v154
    %v156 = vsel %vm153, %v155, %v151
    %v157 = vmul.f32 1.0, %v156
    %v158 = vrcp.pop %v142
    %v159 = vmul.f32 %v142, %v158
    %v160 = vsub.f32 1.0, %v159
    %v161 = vmul.f32 %v158, %v160
    %v162 = vadd.f32 %v158, %v161
    %vm163 = vweird.f32 %v142
    %vm164 = vweird.f32 %v158
    %vm165 = vmor %vm163, %vm164
    %v166 = vsel %vm165, %v158, %v162
    %v167 = vand.u32 2147483647, %v142
    %vm168 = vcmp.eq.f32.partialorder %v167, 8.507059e+37
    %v169 = vand.u32 %v142, 2147483648
    %v170 = vor.u32 1.1754944e-38, %v169
    %v171 = vsel %vm168, %v170, %v166
    %v172 = vmul.f32 1.0, %v171
    %v173 = vlaneseq
    %v174 = vand.u32 %v173, 127
    %vm175 = vcmp.lt.s32.totalorder %v174, 8
    %v176 = vsel %vm175, %v112, %v157
    %v177 = vsel %vm175, %v127, %v172
    %v178 = vmul.f32 %v89, %v176
    %v179 = vmul.f32 %v90, %v177
    %v180 = vperm.slane %v87, 0
    %v181 = vlaneseq
    %v182 = vshrl.u32 %v181, 7
    %184 = vset.pattern.permute.xlu0 %v182
    %185 = vperm.xlu0 %184, %v180
    %v186 = vpop.permute.xlu0 %185
    %v187 = vlaneseq
    %v188 = vshrl.u32 %v187, 7
    %v189 = vadd.s32 %v188, 8
    %190 = vset.pattern.permute.xlu0 %v189
    %191 = vperm.xlu0 %190, %v180
    %v192 = vpop.permute.xlu0 %191
    %v193 = vlaneseq
    %v194 = vshrl.u32 %v193, 7
    %v195 = vadd.s32 %v194, 16
    %196 = vset.pattern.permute.xlu0 %v195
    %197 = vperm.xlu0 %196, %v180
    %v198 = vpop.permute.xlu0 %197
    %v199 = vperm.slane %v87, 1
    %v200 = vlaneseq
    %v201 = vshrl.u32 %v200, 7
    %203 = vset.pattern.permute.xlu0 %v201
    %204 = vperm.xlu0 %203, %v199
    %v205 = vpop.permute.xlu0 %204
    %v206 = vlaneseq
    %v207 = vshrl.u32 %v206, 7
    %v208 = vadd.s32 %v207, 8
    %209 = vset.pattern.permute.xlu0 %v208
    %210 = vperm.xlu0 %209, %v199
    %v211 = vpop.permute.xlu0 %210
    %v212 = vlaneseq
    %v213 = vshrl.u32 %v212, 7
    %v214 = vadd.s32 %v213, 16
    %215 = vset.pattern.permute.xlu0 %v214
    %216 = vperm.xlu0 %215, %v199
    %v217 = vpop.permute.xlu0 %216
    %v218 = vperm.slane %v87, 2
    %v219 = vlaneseq
    %v220 = vshrl.u32 %v219, 7
    %222 = vset.pattern.permute.xlu0 %v220
    %223 = vperm.xlu0 %222, %v218
    %v224 = vpop.permute.xlu0 %223
    %v225 = vlaneseq
    %v226 = vshrl.u32 %v225, 7
    %v227 = vadd.s32 %v226, 8
    %228 = vset.pattern.permute.xlu0 %v227
    %229 = vperm.xlu0 %228, %v218
    %v230 = vpop.permute.xlu0 %229
    %v231 = vlaneseq
    %v232 = vshrl.u32 %v231, 7
    %v233 = vadd.s32 %v232, 16
    %234 = vset.pattern.permute.xlu0 %v233
    %235 = vperm.xlu0 %234, %v218
    %v236 = vpop.permute.xlu0 %235
    %v237 = vperm.slane %v87, 3
    %v238 = vlaneseq
    %v239 = vshrl.u32 %v238, 7
    %241 = vset.pattern.permute.xlu0 %v239
    %242 = vperm.xlu0 %241, %v237
    %v243 = vpop.permute.xlu0 %242
    %v244 = vlaneseq
    %v245 = vshrl.u32 %v244, 7
    %v246 = vadd.s32 %v245, 8
    %247 = vset.pattern.permute.xlu0 %v246
    %248 = vperm.xlu0 %247, %v237
    %v249 = vpop.permute.xlu0 %248
    %v250 = vlaneseq
    %v251 = vshrl.u32 %v250, 7
    %v252 = vadd.s32 %v251, 16
    %253 = vset.pattern.permute.xlu0 %v252
    %254 = vperm.xlu0 %253, %v237
    %v255 = vpop.permute.xlu0 %254
    %v256 = vperm.slane %v87, 4
    %v257 = vlaneseq
    %v258 = vshrl.u32 %v257, 7
    %260 = vset.pattern.permute.xlu0 %v258
    %261 = vperm.xlu0 %260, %v256
    %v262 = vpop.permute.xlu0 %261
    %v263 = vlaneseq
    %v264 = vshrl.u32 %v263, 7
    %v265 = vadd.s32 %v264, 8
    %266 = vset.pattern.permute.xlu0 %v265
    %267 = vperm.xlu0 %266, %v256
    %v268 = vpop.permute.xlu0 %267
    %v269 = vlaneseq
    %v270 = vshrl.u32 %v269, 7
    %v271 = vadd.s32 %v270, 16
    %272 = vset.pattern.permute.xlu0 %v271
    %273 = vperm.xlu0 %272, %v256
    %v274 = vpop.permute.xlu0 %273
    %v275 = vperm.slane %v87, 5
    %v276 = vlaneseq
    %v277 = vshrl.u32 %v276, 7
    %279 = vset.pattern.permute.xlu0 %v277
    %280 = vperm.xlu0 %279, %v275
    %v281 = vpop.permute.xlu0 %280
    %v282 = vlaneseq
    %v283 = vshrl.u32 %v282, 7
    %v284 = vadd.s32 %v283, 8
    %285 = vset.pattern.permute.xlu0 %v284
    %286 = vperm.xlu0 %285, %v275
    %v287 = vpop.permute.xlu0 %286
    %v288 = vlaneseq
    %v289 = vshrl.u32 %v288, 7
    %v290 = vadd.s32 %v289, 16
    %291 = vset.pattern.permute.xlu0 %v290
    %292 = vperm.xlu0 %291, %v275
    %v293 = vpop.permute.xlu0 %292
    %v294 = vperm.slane %v87, 6
    %v295 = vlaneseq
    %v296 = vshrl.u32 %v295, 7
    %298 = vset.pattern.permute.xlu0 %v296
    %299 = vperm.xlu0 %298, %v294
    %v300 = vpop.permute.xlu0 %299
    %v301 = vlaneseq
    %v302 = vshrl.u32 %v301, 7
    %v303 = vadd.s32 %v302, 8
    %304 = vset.pattern.permute.xlu0 %v303
    %305 = vperm.xlu0 %304, %v294
    %v306 = vpop.permute.xlu0 %305
    %v307 = vlaneseq
    %v308 = vshrl.u32 %v307, 7
    %v309 = vadd.s32 %v308, 16
    %310 = vset.pattern.permute.xlu0 %v309
    %311 = vperm.xlu0 %310, %v294
    %v312 = vpop.permute.xlu0 %311
    %v313 = vperm.slane %v87, 7
    %v314 = vlaneseq
    %v315 = vshrl.u32 %v314, 7
    %317 = vset.pattern.permute.xlu0 %v315
    %318 = vperm.xlu0 %317, %v313
    %v319 = vpop.permute.xlu0 %318
    %v320 = vlaneseq
    %v321 = vshrl.u32 %v320, 7
    %v322 = vadd.s32 %v321, 8
    %323 = vset.pattern.permute.xlu0 %v322
    %324 = vperm.xlu0 %323, %v313
    %v325 = vpop.permute.xlu0 %324
    %v326 = vlaneseq
    %v327 = vshrl.u32 %v326, 7
    %v328 = vadd.s32 %v327, 16
    %329 = vset.pattern.permute.xlu0 %v328
    %330 = vperm.xlu0 %329, %v313
    %v331 = vpop.permute.xlu0 %330
    %v332 = vperm.slane %v88, 0
    %v333 = vlaneseq
    %v334 = vshrl.u32 %v333, 7
    %336 = vset.pattern.permute.xlu0 %v334
    %337 = vperm.xlu0 %336, %v332
    %v338 = vpop.permute.xlu0 %337
    %v339 = vlaneseq
    %v340 = vshrl.u32 %v339, 7
    %v341 = vadd.s32 %v340, 8
    %342 = vset.pattern.permute.xlu0 %v341
    %343 = vperm.xlu0 %342, %v332
    %v344 = vpop.permute.xlu0 %343
    %v345 = vlaneseq
    %v346 = vshrl.u32 %v345, 7
    %v347 = vadd.s32 %v346, 16
    %348 = vset.pattern.permute.xlu0 %v347
    %349 = vperm.xlu0 %348, %v332
    %v350 = vpop.permute.xlu0 %349
    %v351 = vperm.slane %v88, 1
    %v352 = vlaneseq
    %v353 = vshrl.u32 %v352, 7
    %355 = vset.pattern.permute.xlu0 %v353
    %356 = vperm.xlu0 %355, %v351
    %v357 = vpop.permute.xlu0 %356
    %v358 = vlaneseq
    %v359 = vshrl.u32 %v358, 7
    %v360 = vadd.s32 %v359, 8
    %361 = vset.pattern.permute.xlu0 %v360
    %362 = vperm.xlu0 %361, %v351
    %v363 = vpop.permute.xlu0 %362
    %v364 = vlaneseq
    %v365 = vshrl.u32 %v364, 7
    %v366 = vadd.s32 %v365, 16
    %367 = vset.pattern.permute.xlu0 %v366
    %368 = vperm.xlu0 %367, %v351
    %v369 = vpop.permute.xlu0 %368
    %v370 = vperm.slane %v88, 2
    %v371 = vlaneseq
    %v372 = vshrl.u32 %v371, 7
    %374 = vset.pattern.permute.xlu0 %v372
    %375 = vperm.xlu0 %374, %v370
    %v376 = vpop.permute.xlu0 %375
    %v377 = vlaneseq
    %v378 = vshrl.u32 %v377, 7
    %v379 = vadd.s32 %v378, 8
    %380 = vset.pattern.permute.xlu0 %v379
    %381 = vperm.xlu0 %380, %v370
    %v382 = vpop.permute.xlu0 %381
    %v383 = vlaneseq
    %v384 = vshrl.u32 %v383, 7
    %v385 = vadd.s32 %v384, 16
    %386 = vset.pattern.permute.xlu0 %v385
    %387 = vperm.xlu0 %386, %v370
    %v388 = vpop.permute.xlu0 %387
    %v389 = vperm.slane %v88, 3
    %v390 = vlaneseq
    %v391 = vshrl.u32 %v390, 7
    %393 = vset.pattern.permute.xlu0 %v391
    %394 = vperm.xlu0 %393, %v389
    %v395 = vpop.permute.xlu0 %394
    %v396 = vlaneseq
    %v397 = vshrl.u32 %v396, 7
    %v398 = vadd.s32 %v397, 8
    %399 = vset.pattern.permute.xlu0 %v398
    %400 = vperm.xlu0 %399, %v389
    %v401 = vpop.permute.xlu0 %400
    %v402 = vlaneseq
    %v403 = vshrl.u32 %v402, 7
    %v404 = vadd.s32 %v403, 16
    %405 = vset.pattern.permute.xlu0 %v404
    %406 = vperm.xlu0 %405, %v389
    %v407 = vpop.permute.xlu0 %406
    %v408 = vperm.slane %v88, 4
    %v409 = vlaneseq
    %v410 = vshrl.u32 %v409, 7
    %412 = vset.pattern.permute.xlu0 %v410
    %413 = vperm.xlu0 %412, %v408
    %v414 = vpop.permute.xlu0 %413
    %v415 = vlaneseq
    %v416 = vshrl.u32 %v415, 7
    %v417 = vadd.s32 %v416, 8
    %418 = vset.pattern.permute.xlu0 %v417
    %419 = vperm.xlu0 %418, %v408
    %v420 = vpop.permute.xlu0 %419
    %v421 = vlaneseq
    %v422 = vshrl.u32 %v421, 7
    %v423 = vadd.s32 %v422, 16
    %424 = vset.pattern.permute.xlu0 %v423
    %425 = vperm.xlu0 %424, %v408
    %v426 = vpop.permute.xlu0 %425
    %v427 = vperm.slane %v88, 5
    %v428 = vlaneseq
    %v429 = vshrl.u32 %v428, 7
    %431 = vset.pattern.permute.xlu0 %v429
    %432 = vperm.xlu0 %431, %v427
    %v433 = vpop.permute.xlu0 %432
    %v434 = vlaneseq
    %v435 = vshrl.u32 %v434, 7
    %v436 = vadd.s32 %v435, 8
    %437 = vset.pattern.permute.xlu0 %v436
    %438 = vperm.xlu0 %437, %v427
    %v439 = vpop.permute.xlu0 %438
    %v440 = vlaneseq
    %v441 = vshrl.u32 %v440, 7
    %v442 = vadd.s32 %v441, 16
    %443 = vset.pattern.permute.xlu0 %v442
    %444 = vperm.xlu0 %443, %v427
    %v445 = vpop.permute.xlu0 %444
    %v446 = vperm.slane %v88, 6
    %v447 = vlaneseq
    %v448 = vshrl.u32 %v447, 7
    %450 = vset.pattern.permute.xlu0 %v448
    %451 = vperm.xlu0 %450, %v446
    %v452 = vpop.permute.xlu0 %451
    %v453 = vlaneseq
    %v454 = vshrl.u32 %v453, 7
    %v455 = vadd.s32 %v454, 8
    %456 = vset.pattern.permute.xlu0 %v455
    %457 = vperm.xlu0 %456, %v446
    %v458 = vpop.permute.xlu0 %457
    %v459 = vlaneseq
    %v460 = vshrl.u32 %v459, 7
    %v461 = vadd.s32 %v460, 16
    %462 = vset.pattern.permute.xlu0 %v461
    %463 = vperm.xlu0 %462, %v446
    %v464 = vpop.permute.xlu0 %463
    %v465 = vperm.slane %v88, 7
    %v466 = vlaneseq
    %v467 = vshrl.u32 %v466, 7
    %469 = vset.pattern.permute.xlu0 %v467
    %470 = vperm.xlu0 %469, %v465
    %v471 = vpop.permute.xlu0 %470
    %v472 = vlaneseq
    %v473 = vshrl.u32 %v472, 7
    %v474 = vadd.s32 %v473, 8
    %475 = vset.pattern.permute.xlu0 %v474
    %476 = vperm.xlu0 %475, %v465
    %v477 = vpop.permute.xlu0 %476
    %v478 = vlaneseq
    %v479 = vshrl.u32 %v478, 7
    %v480 = vadd.s32 %v479, 16
    %481 = vset.pattern.permute.xlu0 %v480
    %482 = vperm.xlu0 %481, %v465
    %v483 = vpop.permute.xlu0 %482
    %vm484 = vcmp.eq.s32.totalorder %v186, %v174
    %vm485 = vcmp.eq.s32.totalorder %v192, %v174
    %vm486 = vcmp.eq.s32.totalorder %v198, %v174
    %vm487 = vcmp.eq.s32.totalorder %v205, %v174
    %vm488 = vcmp.eq.s32.totalorder %v211, %v174
    %vm489 = vcmp.eq.s32.totalorder %v217, %v174
    %vm490 = vcmp.eq.s32.totalorder %v224, %v174
    %vm491 = vcmp.eq.s32.totalorder %v230, %v174
    %vm492 = vcmp.eq.s32.totalorder %v236, %v174
    %vm493 = vcmp.eq.s32.totalorder %v243, %v174
    %vm494 = vcmp.eq.s32.totalorder %v249, %v174
    %vm495 = vcmp.eq.s32.totalorder %v255, %v174
    %vm496 = vcmp.eq.s32.totalorder %v262, %v174
    %vm497 = vcmp.eq.s32.totalorder %v268, %v174
    %vm498 = vcmp.eq.s32.totalorder %v274, %v174
    %vm499 = vcmp.eq.s32.totalorder %v281, %v174
    %vm500 = vcmp.eq.s32.totalorder %v287, %v174
    %vm501 = vcmp.eq.s32.totalorder %v293, %v174
    %vm502 = vcmp.eq.s32.totalorder %v300, %v174
    %vm503 = vcmp.eq.s32.totalorder %v306, %v174
    %vm504 = vcmp.eq.s32.totalorder %v312, %v174
    %vm505 = vcmp.eq.s32.totalorder %v319, %v174
    %vm506 = vcmp.eq.s32.totalorder %v325, %v174
    %vm507 = vcmp.eq.s32.totalorder %v331, %v174
    %vm508 = vcmp.eq.s32.totalorder %v338, %v174
    %vm509 = vcmp.eq.s32.totalorder %v344, %v174
    %vm510 = vcmp.eq.s32.totalorder %v350, %v174
    %vm511 = vcmp.eq.s32.totalorder %v357, %v174
    %vm512 = vcmp.eq.s32.totalorder %v363, %v174
    %vm513 = vcmp.eq.s32.totalorder %v369, %v174
    %vm514 = vcmp.eq.s32.totalorder %v376, %v174
    %vm515 = vcmp.eq.s32.totalorder %v382, %v174
    %vm516 = vcmp.eq.s32.totalorder %v388, %v174
    %vm517 = vcmp.eq.s32.totalorder %v395, %v174
    %vm518 = vcmp.eq.s32.totalorder %v401, %v174
    %vm519 = vcmp.eq.s32.totalorder %v407, %v174
    %vm520 = vcmp.eq.s32.totalorder %v414, %v174
    %vm521 = vcmp.eq.s32.totalorder %v420, %v174
    %vm522 = vcmp.eq.s32.totalorder %v426, %v174
    %vm523 = vcmp.eq.s32.totalorder %v433, %v174
    %vm524 = vcmp.eq.s32.totalorder %v439, %v174
    %vm525 = vcmp.eq.s32.totalorder %v445, %v174
    %vm526 = vcmp.eq.s32.totalorder %v452, %v174
    %vm527 = vcmp.eq.s32.totalorder %v458, %v174
    %vm528 = vcmp.eq.s32.totalorder %v464, %v174
    %vm529 = vcmp.eq.s32.totalorder %v471, %v174
    %vm530 = vcmp.eq.s32.totalorder %v477, %v174
    %vm531 = vcmp.eq.s32.totalorder %v483, %v174
    %v532 = vperm.slane %v178, 0
    %v533 = vlaneseq
    %v534 = vshrl.u32 %v533, 7
    %536 = vset.pattern.permute.xlu0 %v534
    %537 = vperm.xlu0 %536, %v532
    %v538 = vpop.permute.xlu0 %537
    %v539 = vlaneseq
    %v540 = vshrl.u32 %v539, 7
    %v541 = vadd.s32 %v540, 8
    %542 = vset.pattern.permute.xlu0 %v541
    %543 = vperm.xlu0 %542, %v532
    %v544 = vpop.permute.xlu0 %543
    %v545 = vlaneseq
    %v546 = vshrl.u32 %v545, 7
    %v547 = vadd.s32 %v546, 16
    %548 = vset.pattern.permute.xlu0 %v547
    %549 = vperm.xlu0 %548, %v532
    %v550 = vpop.permute.xlu0 %549
    %v551 = vperm.slane %v178, 1
    %v552 = vlaneseq
    %v553 = vshrl.u32 %v552, 7
    %555 = vset.pattern.permute.xlu0 %v553
    %556 = vperm.xlu0 %555, %v551
    %v557 = vpop.permute.xlu0 %556
    %v558 = vlaneseq
    %v559 = vshrl.u32 %v558, 7
    %v560 = vadd.s32 %v559, 8
    %561 = vset.pattern.permute.xlu0 %v560
    %562 = vperm.xlu0 %561, %v551
    %v563 = vpop.permute.xlu0 %562
    %v564 = vlaneseq
    %v565 = vshrl.u32 %v564, 7
    %v566 = vadd.s32 %v565, 16
    %567 = vset.pattern.permute.xlu0 %v566
    %568 = vperm.xlu0 %567, %v551
    %v569 = vpop.permute.xlu0 %568
    %v570 = vperm.slane %v178, 2
    %v571 = vlaneseq
    %v572 = vshrl.u32 %v571, 7
    %574 = vset.pattern.permute.xlu0 %v572
    %575 = vperm.xlu0 %574, %v570
    %v576 = vpop.permute.xlu0 %575
    %v577 = vlaneseq
    %v578 = vshrl.u32 %v577, 7
    %v579 = vadd.s32 %v578, 8
    %580 = vset.pattern.permute.xlu0 %v579
    %581 = vperm.xlu0 %580, %v570
    %v582 = vpop.permute.xlu0 %581
    %v583 = vlaneseq
    %v584 = vshrl.u32 %v583, 7
    %v585 = vadd.s32 %v584, 16
    %586 = vset.pattern.permute.xlu0 %v585
    %587 = vperm.xlu0 %586, %v570
    %v588 = vpop.permute.xlu0 %587
    %v589 = vperm.slane %v178, 3
    %v590 = vlaneseq
    %v591 = vshrl.u32 %v590, 7
    %593 = vset.pattern.permute.xlu0 %v591
    %594 = vperm.xlu0 %593, %v589
    %v595 = vpop.permute.xlu0 %594
    %v596 = vlaneseq
    %v597 = vshrl.u32 %v596, 7
    %v598 = vadd.s32 %v597, 8
    %599 = vset.pattern.permute.xlu0 %v598
    %600 = vperm.xlu0 %599, %v589
    %v601 = vpop.permute.xlu0 %600
    %v602 = vlaneseq
    %v603 = vshrl.u32 %v602, 7
    %v604 = vadd.s32 %v603, 16
    %605 = vset.pattern.permute.xlu0 %v604
    %606 = vperm.xlu0 %605, %v589
    %v607 = vpop.permute.xlu0 %606
    %v608 = vperm.slane %v178, 4
    %v609 = vlaneseq
    %v610 = vshrl.u32 %v609, 7
    %612 = vset.pattern.permute.xlu0 %v610
    %613 = vperm.xlu0 %612, %v608
    %v614 = vpop.permute.xlu0 %613
    %v615 = vlaneseq
    %v616 = vshrl.u32 %v615, 7
    %v617 = vadd.s32 %v616, 8
    %618 = vset.pattern.permute.xlu0 %v617
    %619 = vperm.xlu0 %618, %v608
    %v620 = vpop.permute.xlu0 %619
    %v621 = vlaneseq
    %v622 = vshrl.u32 %v621, 7
    %v623 = vadd.s32 %v622, 16
    %624 = vset.pattern.permute.xlu0 %v623
    %625 = vperm.xlu0 %624, %v608
    %v626 = vpop.permute.xlu0 %625
    %v627 = vperm.slane %v178, 5
    %v628 = vlaneseq
    %v629 = vshrl.u32 %v628, 7
    %631 = vset.pattern.permute.xlu0 %v629
    %632 = vperm.xlu0 %631, %v627
    %v633 = vpop.permute.xlu0 %632
    %v634 = vlaneseq
    %v635 = vshrl.u32 %v634, 7
    %v636 = vadd.s32 %v635, 8
    %637 = vset.pattern.permute.xlu0 %v636
    %638 = vperm.xlu0 %637, %v627
    %v639 = vpop.permute.xlu0 %638
    %v640 = vlaneseq
    %v641 = vshrl.u32 %v640, 7
    %v642 = vadd.s32 %v641, 16
    %643 = vset.pattern.permute.xlu0 %v642
    %644 = vperm.xlu0 %643, %v627
    %v645 = vpop.permute.xlu0 %644
    %v646 = vperm.slane %v178, 6
    %v647 = vlaneseq
    %v648 = vshrl.u32 %v647, 7
    %650 = vset.pattern.permute.xlu0 %v648
    %651 = vperm.xlu0 %650, %v646
    %v652 = vpop.permute.xlu0 %651
    %v653 = vlaneseq
    %v654 = vshrl.u32 %v653, 7
    %v655 = vadd.s32 %v654, 8
    %656 = vset.pattern.permute.xlu0 %v655
    %657 = vperm.xlu0 %656, %v646
    %v658 = vpop.permute.xlu0 %657
    %v659 = vlaneseq
    %v660 = vshrl.u32 %v659, 7
    %v661 = vadd.s32 %v660, 16
    %662 = vset.pattern.permute.xlu0 %v661
    %663 = vperm.xlu0 %662, %v646
    %v664 = vpop.permute.xlu0 %663
    %v665 = vperm.slane %v178, 7
    %v666 = vlaneseq
    %v667 = vshrl.u32 %v666, 7
    %669 = vset.pattern.permute.xlu0 %v667
    %670 = vperm.xlu0 %669, %v665
    %v671 = vpop.permute.xlu0 %670
    %v672 = vlaneseq
    %v673 = vshrl.u32 %v672, 7
    %v674 = vadd.s32 %v673, 8
    %675 = vset.pattern.permute.xlu0 %v674
    %676 = vperm.xlu0 %675, %v665
    %v677 = vpop.permute.xlu0 %676
    %v678 = vlaneseq
    %v679 = vshrl.u32 %v678, 7
    %v680 = vadd.s32 %v679, 16
    %681 = vset.pattern.permute.xlu0 %v680
    %682 = vperm.xlu0 %681, %v665
    %v683 = vpop.permute.xlu0 %682
    %v684 = vperm.slane %v179, 0
    %v685 = vlaneseq
    %v686 = vshrl.u32 %v685, 7
    %688 = vset.pattern.permute.xlu0 %v686
    %689 = vperm.xlu0 %688, %v684
    %v690 = vpop.permute.xlu0 %689
    %v691 = vlaneseq
    %v692 = vshrl.u32 %v691, 7
    %v693 = vadd.s32 %v692, 8
    %694 = vset.pattern.permute.xlu0 %v693
    %695 = vperm.xlu0 %694, %v684
    %v696 = vpop.permute.xlu0 %695
    %v697 = vlaneseq
    %v698 = vshrl.u32 %v697, 7
    %v699 = vadd.s32 %v698, 16
    %700 = vset.pattern.permute.xlu0 %v699
    %701 = vperm.xlu0 %700, %v684
    %v702 = vpop.permute.xlu0 %701
    %v703 = vperm.slane %v179, 1
    %v704 = vlaneseq
    %v705 = vshrl.u32 %v704, 7
    %707 = vset.pattern.permute.xlu0 %v705
    %708 = vperm.xlu0 %707, %v703
    %v709 = vpop.permute.xlu0 %708
    %v710 = vlaneseq
    %v711 = vshrl.u32 %v710, 7
    %v712 = vadd.s32 %v711, 8
    %713 = vset.pattern.permute.xlu0 %v712
    %714 = vperm.xlu0 %713, %v703
    %v715 = vpop.permute.xlu0 %714
    %v716 = vlaneseq
    %v717 = vshrl.u32 %v716, 7
    %v718 = vadd.s32 %v717, 16
    %719 = vset.pattern.permute.xlu0 %v718
    %720 = vperm.xlu0 %719, %v703
    %v721 = vpop.permute.xlu0 %720
    %v722 = vperm.slane %v179, 2
    %v723 = vlaneseq
    %v724 = vshrl.u32 %v723, 7
    %726 = vset.pattern.permute.xlu0 %v724
    %727 = vperm.xlu0 %726, %v722
    %v728 = vpop.permute.xlu0 %727
    %v729 = vlaneseq
    %v730 = vshrl.u32 %v729, 7
    %v731 = vadd.s32 %v730, 8
    %732 = vset.pattern.permute.xlu0 %v731
    %733 = vperm.xlu0 %732, %v722
    %v734 = vpop.permute.xlu0 %733
    %v735 = vlaneseq
    %v736 = vshrl.u32 %v735, 7
    %v737 = vadd.s32 %v736, 16
    %738 = vset.pattern.permute.xlu0 %v737
    %739 = vperm.xlu0 %738, %v722
    %v740 = vpop.permute.xlu0 %739
    %v741 = vperm.slane %v179, 3
    %v742 = vlaneseq
    %v743 = vshrl.u32 %v742, 7
    %745 = vset.pattern.permute.xlu0 %v743
    %746 = vperm.xlu0 %745, %v741
    %v747 = vpop.permute.xlu0 %746
    %v748 = vlaneseq
    %v749 = vshrl.u32 %v748, 7
    %v750 = vadd.s32 %v749, 8
    %751 = vset.pattern.permute.xlu0 %v750
    %752 = vperm.xlu0 %751, %v741
    %v753 = vpop.permute.xlu0 %752
    %v754 = vlaneseq
    %v755 = vshrl.u32 %v754, 7
    %v756 = vadd.s32 %v755, 16
    %757 = vset.pattern.permute.xlu0 %v756
    %758 = vperm.xlu0 %757, %v741
    %v759 = vpop.permute.xlu0 %758
    %v760 = vperm.slane %v179, 4
    %v761 = vlaneseq
    %v762 = vshrl.u32 %v761, 7
    %764 = vset.pattern.permute.xlu0 %v762
    %765 = vperm.xlu0 %764, %v760
    %v766 = vpop.permute.xlu0 %765
    %v767 = vlaneseq
    %v768 = vshrl.u32 %v767, 7
    %v769 = vadd.s32 %v768, 8
    %770 = vset.pattern.permute.xlu0 %v769
    %771 = vperm.xlu0 %770, %v760
    %v772 = vpop.permute.xlu0 %771
    %v773 = vlaneseq
    %v774 = vshrl.u32 %v773, 7
    %v775 = vadd.s32 %v774, 16
    %776 = vset.pattern.permute.xlu0 %v775
    %777 = vperm.xlu0 %776, %v760
    %v778 = vpop.permute.xlu0 %777
    %v779 = vperm.slane %v179, 5
    %v780 = vlaneseq
    %v781 = vshrl.u32 %v780, 7
    %783 = vset.pattern.permute.xlu0 %v781
    %784 = vperm.xlu0 %783, %v779
    %v785 = vpop.permute.xlu0 %784
    %v786 = vlaneseq
    %v787 = vshrl.u32 %v786, 7
    %v788 = vadd.s32 %v787, 8
    %789 = vset.pattern.permute.xlu0 %v788
    %790 = vperm.xlu0 %789, %v779
    %v791 = vpop.permute.xlu0 %790
    %v792 = vlaneseq
    %v793 = vshrl.u32 %v792, 7
    %v794 = vadd.s32 %v793, 16
    %795 = vset.pattern.permute.xlu0 %v794
    %796 = vperm.xlu0 %795, %v779
    %v797 = vpop.permute.xlu0 %796
    %v798 = vperm.slane %v179, 6
    %v799 = vlaneseq
    %v800 = vshrl.u32 %v799, 7
    %802 = vset.pattern.permute.xlu0 %v800
    %803 = vperm.xlu0 %802, %v798
    %v804 = vpop.permute.xlu0 %803
    %v805 = vlaneseq
    %v806 = vshrl.u32 %v805, 7
    %v807 = vadd.s32 %v806, 8
    %808 = vset.pattern.permute.xlu0 %v807
    %809 = vperm.xlu0 %808, %v798
    %v810 = vpop.permute.xlu0 %809
    %v811 = vlaneseq
    %v812 = vshrl.u32 %v811, 7
    %v813 = vadd.s32 %v812, 16
    %814 = vset.pattern.permute.xlu0 %v813
    %815 = vperm.xlu0 %814, %v798
    %v816 = vpop.permute.xlu0 %815
    %v817 = vperm.slane %v179, 7
    %v818 = vlaneseq
    %v819 = vshrl.u32 %v818, 7
    %821 = vset.pattern.permute.xlu0 %v819
    %822 = vperm.xlu0 %821, %v817
    %v823 = vpop.permute.xlu0 %822
    %v824 = vlaneseq
    %v825 = vshrl.u32 %v824, 7
    %v826 = vadd.s32 %v825, 8
    %827 = vset.pattern.permute.xlu0 %v826
    %828 = vperm.xlu0 %827, %v817
    %v829 = vpop.permute.xlu0 %828
    %v830 = vlaneseq
    %v831 = vshrl.u32 %v830, 7
    %v832 = vadd.s32 %v831, 16
    %833 = vset.pattern.permute.xlu0 %v832
    %834 = vperm.xlu0 %833, %v817
    %v835 = vpop.permute.xlu0 %834
    %v836 = vsel %vm484, %v538, 0.0
    %v837 = vsel %vm485, %v544, 0.0
    %v838 = vsel %vm486, %v550, 0.0
    %v839 = vsel %vm487, %v557, 0.0
    %v840 = vsel %vm488, %v563, 0.0
    %v841 = vsel %vm489, %v569, 0.0
    %v842 = vsel %vm490, %v576, 0.0
    %v843 = vsel %vm491, %v582, 0.0
    %v844 = vsel %vm492, %v588, 0.0
    %v845 = vsel %vm493, %v595, 0.0
    %v846 = vsel %vm494, %v601, 0.0
    %v847 = vsel %vm495, %v607, 0.0
    %v848 = vsel %vm496, %v614, 0.0
    %v849 = vsel %vm497, %v620, 0.0
    %v850 = vsel %vm498, %v626, 0.0
    %v851 = vsel %vm499, %v633, 0.0
    %v852 = vsel %vm500, %v639, 0.0
    %v853 = vsel %vm501, %v645, 0.0
    %v854 = vsel %vm502, %v652, 0.0
    %v855 = vsel %vm503, %v658, 0.0
    %v856 = vsel %vm504, %v664, 0.0
    %v857 = vsel %vm505, %v671, 0.0
    %v858 = vsel %vm506, %v677, 0.0
    %v859 = vsel %vm507, %v683, 0.0
    %v860 = vsel %vm508, %v690, 0.0
    %v861 = vsel %vm509, %v696, 0.0
    %v862 = vsel %vm510, %v702, 0.0
    %v863 = vsel %vm511, %v709, 0.0
    %v864 = vsel %vm512, %v715, 0.0
    %v865 = vsel %vm513, %v721, 0.0
    %v866 = vsel %vm514, %v728, 0.0
    %v867 = vsel %vm515, %v734, 0.0
    %v868 = vsel %vm516, %v740, 0.0
    %v869 = vsel %vm517, %v747, 0.0
    %v870 = vsel %vm518, %v753, 0.0
    %v871 = vsel %vm519, %v759, 0.0
    %v872 = vsel %vm520, %v766, 0.0
    %v873 = vsel %vm521, %v772, 0.0
    %v874 = vsel %vm522, %v778, 0.0
    %v875 = vsel %vm523, %v785, 0.0
    %v876 = vsel %vm524, %v791, 0.0
    %v877 = vsel %vm525, %v797, 0.0
    %v878 = vsel %vm526, %v804, 0.0
    %v879 = vsel %vm527, %v810, 0.0
    %v880 = vsel %vm528, %v816, 0.0
    %v881 = vsel %vm529, %v823, 0.0
    %v882 = vsel %vm530, %v829, 0.0
    %v883 = vsel %vm531, %v835, 0.0
    %v884 = vadd.f32 %v836, %v837
    %vm885 = vcmask 1043456
    %v886 = vsel %vm885, %v838, 0.0
    %v887 = vadd.f32 %v884, %v886
    %v888 = vrot.slane %v887, 4
    %v889 = vadd.f32 %v887, %v888
    %v890 = vrot.slane %v889, 2
    %v891 = vadd.f32 %v889, %v890
    %v892 = vrot.slane %v891, 1
    %v893 = vadd.f32 %v891, %v892
    %v894 = vadd.f32 %v839, %v840
    %v895 = vsel %vm885, %v841, 0.0
    %v896 = vadd.f32 %v894, %v895
    %v897 = vrot.slane %v896, 4
    %v898 = vadd.f32 %v896, %v897
    %v899 = vrot.slane %v898, 2
    %v900 = vadd.f32 %v898, %v899
    %v901 = vrot.slane %v900, 1
    %v902 = vadd.f32 %v900, %v901
    %v903 = vadd.f32 %v842, %v843
    %v904 = vsel %vm885, %v844, 0.0
    %v905 = vadd.f32 %v903, %v904
    %v906 = vrot.slane %v905, 4
    %v907 = vadd.f32 %v905, %v906
    %v908 = vrot.slane %v907, 2
    %v909 = vadd.f32 %v907, %v908
    %v910 = vrot.slane %v909, 1
    %v911 = vadd.f32 %v909, %v910
    %v912 = vadd.f32 %v845, %v846
    %v913 = vsel %vm885, %v847, 0.0
    %v914 = vadd.f32 %v912, %v913
    %v915 = vrot.slane %v914, 4
    %v916 = vadd.f32 %v914, %v915
    %v917 = vrot.slane %v916, 2
    %v918 = vadd.f32 %v916, %v917
    %v919 = vrot.slane %v918, 1
    %v920 = vadd.f32 %v918, %v919
    %v921 = vadd.f32 %v848, %v849
    %v922 = vsel %vm885, %v850, 0.0
    %v923 = vadd.f32 %v921, %v922
    %v924 = vrot.slane %v923, 4
    %v925 = vadd.f32 %v923, %v924
    %v926 = vrot.slane %v925, 2
    %v927 = vadd.f32 %v925, %v926
    %v928 = vrot.slane %v927, 1
    %v929 = vadd.f32 %v927, %v928
    %v930 = vadd.f32 %v851, %v852
    %v931 = vsel %vm885, %v853, 0.0
    %v932 = vadd.f32 %v930, %v931
    %v933 = vrot.slane %v932, 4
    %v934 = vadd.f32 %v932, %v933
    %v935 = vrot.slane %v934, 2
    %v936 = vadd.f32 %v934, %v935
    %v937 = vrot.slane %v936, 1
    %v938 = vadd.f32 %v936, %v937
    %v939 = vadd.f32 %v854, %v855
    %v940 = vsel %vm885, %v856, 0.0
    %v941 = vadd.f32 %v939, %v940
    %v942 = vrot.slane %v941, 4
    %v943 = vadd.f32 %v941, %v942
    %v944 = vrot.slane %v943, 2
    %v945 = vadd.f32 %v943, %v944
    %v946 = vrot.slane %v945, 1
    %v947 = vadd.f32 %v945, %v946
    %v948 = vadd.f32 %v857, %v858
    %v949 = vsel %vm885, %v859, 0.0
    %v950 = vadd.f32 %v948, %v949
    %v951 = vrot.slane %v950, 4
    %v952 = vadd.f32 %v950, %v951
    %v953 = vrot.slane %v952, 2
    %v954 = vadd.f32 %v952, %v953
    %v955 = vrot.slane %v954, 1
    %v956 = vadd.f32 %v954, %v955
    %v957 = vadd.f32 %v860, %v861
    %v958 = vsel %vm885, %v862, 0.0
    %v959 = vadd.f32 %v957, %v958
    %v960 = vrot.slane %v959, 4
    %v961 = vadd.f32 %v959, %v960
    %v962 = vrot.slane %v961, 2
    %v963 = vadd.f32 %v961, %v962
    %v964 = vrot.slane %v963, 1
    %v965 = vadd.f32 %v963, %v964
    %v966 = vadd.f32 %v863, %v864
    %v967 = vsel %vm885, %v865, 0.0
    %v968 = vadd.f32 %v966, %v967
    %v969 = vrot.slane %v968, 4
    %v970 = vadd.f32 %v968, %v969
    %v971 = vrot.slane %v970, 2
    %v972 = vadd.f32 %v970, %v971
    %v973 = vrot.slane %v972, 1
    %v974 = vadd.f32 %v972, %v973
    %v975 = vadd.f32 %v866, %v867
    %v976 = vsel %vm885, %v868, 0.0
    %v977 = vadd.f32 %v975, %v976
    %v978 = vrot.slane %v977, 4
    %v979 = vadd.f32 %v977, %v978
    %v980 = vrot.slane %v979, 2
    %v981 = vadd.f32 %v979, %v980
    %v982 = vrot.slane %v981, 1
    %v983 = vadd.f32 %v981, %v982
    %v984 = vadd.f32 %v869, %v870
    %v985 = vsel %vm885, %v871, 0.0
    %v986 = vadd.f32 %v984, %v985
    %v987 = vrot.slane %v986, 4
    %v988 = vadd.f32 %v986, %v987
    %v989 = vrot.slane %v988, 2
    %v990 = vadd.f32 %v988, %v989
    %v991 = vrot.slane %v990, 1
    %v992 = vadd.f32 %v990, %v991
    %v993 = vadd.f32 %v872, %v873
    %v994 = vsel %vm885, %v874, 0.0
    %v995 = vadd.f32 %v993, %v994
    %v996 = vrot.slane %v995, 4
    %v997 = vadd.f32 %v995, %v996
    %v998 = vrot.slane %v997, 2
    %v999 = vadd.f32 %v997, %v998
    %v1000 = vrot.slane %v999, 1
    %v1001 = vadd.f32 %v999, %v1000
    %v1002 = vadd.f32 %v875, %v876
    %v1003 = vsel %vm885, %v877, 0.0
    %v1004 = vadd.f32 %v1002, %v1003
    %v1005 = vrot.slane %v1004, 4
    %v1006 = vadd.f32 %v1004, %v1005
    %v1007 = vrot.slane %v1006, 2
    %v1008 = vadd.f32 %v1006, %v1007
    %v1009 = vrot.slane %v1008, 1
    %v1010 = vadd.f32 %v1008, %v1009
    %v1011 = vadd.f32 %v878, %v879
    %v1012 = vsel %vm885, %v880, 0.0
    %v1013 = vadd.f32 %v1011, %v1012
    %v1014 = vrot.slane %v1013, 4
    %v1015 = vadd.f32 %v1013, %v1014
    %v1016 = vrot.slane %v1015, 2
    %v1017 = vadd.f32 %v1015, %v1016
    %v1018 = vrot.slane %v1017, 1
    %v1019 = vadd.f32 %v1017, %v1018
    %v1020 = vadd.f32 %v881, %v882
    %v1021 = vsel %vm885, %v883, 0.0
    %v1022 = vadd.f32 %v1020, %v1021
    %v1023 = vrot.slane %v1022, 4
    %v1024 = vadd.f32 %v1022, %v1023
    %v1025 = vrot.slane %v1024, 2
    %v1026 = vadd.f32 %v1024, %v1025
    %v1027 = vrot.slane %v1026, 1
    %v1028 = vadd.f32 %v1026, %v1027
    %v1029 = vld [vmem:[#allocation7] sm:$0xff]
    %v1030 = vld [vmem:[#allocation7 + $0x8] sm:$0xff]
    %v1031 = vld [vmem:[#allocation7 + $0x10] sm:$0xff]
    %v1032 = vld [vmem:[#allocation7 + $0x18] sm:$0xff]
    %v1033 = vld [vmem:[#allocation7 + $0x20] sm:$0xff]
    %v1034 = vld [vmem:[#allocation7 + $0x28] sm:$0xff]
    %v1035 = vld [vmem:[#allocation7 + $0x30] sm:$0xff]
    %v1036 = vld [vmem:[#allocation7 + $0x38] sm:$0xff]
    %v1037 = vld [vmem:[#allocation7 + $0x40] sm:$0xff]
    %v1038 = vld [vmem:[#allocation7 + $0x48] sm:$0xff]
    %v1039 = vld [vmem:[#allocation7 + $0x50] sm:$0xff]
    %v1040 = vld [vmem:[#allocation7 + $0x58] sm:$0xff]
    %v1041 = vld [vmem:[#allocation7 + $0x60] sm:$0xff]
    %v1042 = vld [vmem:[#allocation7 + $0x68] sm:$0xff]
    %v1043 = vld [vmem:[#allocation7 + $0x70] sm:$0xff]
    %v1044 = vld [vmem:[#allocation7 + $0x78] sm:$0xff]
    %v1045 = vld [vmem:[%s3] sm:$0x1]
    %v1047 = vperm.slane %v1045, 0
    %vm1065 = vcmask 1041409
    %v1066 = vsel %vm1065, %v902, %v893
    %vm1067 = vcmask 1042434
    %v1068 = vsel %vm1067, %v911, %v1066
    %vm1069 = vcmask 1043459
    %v1070 = vsel %vm1069, %v920, %v1068
    %vm1071 = vcmask 1044484
    %v1072 = vsel %vm1071, %v929, %v1070
    %vm1073 = vcmask 1045509
    %v1074 = vsel %vm1073, %v938, %v1072
    %vm1075 = vcmask 1046534
    %v1076 = vsel %vm1075, %v947, %v1074
    %vm1077 = vcmask 1047559
    %v1078 = vsel %vm1077, %v956, %v1076
    %v1079 = vsel %vm1065, %v974, %v965
    %v1080 = vsel %vm1067, %v983, %v1079
    %v1081 = vsel %vm1069, %v992, %v1080
    %v1082 = vsel %vm1071, %v1001, %v1081
    %v1083 = vsel %vm1073, %v1010, %v1082
    %v1084 = vsel %vm1075, %v1019, %v1083
    %v1085 = vsel %vm1077, %v1028, %v1084
    %1088 = vmatpush.msra.mxu0 %v1044
    %1089 = vmatpush.msra.mxu0 %v1043
    %1090 = vmatpush.msra.mxu0 %v1042
    %1091 = vmatpush.msra.mxu0 %v1041
    %1092 = vmatpush.msra.mxu0 %v1040
    %1093 = vmatpush.msra.mxu0 %v1039
    %1094 = vmatpush.msra.mxu0 %v1038
    %1095 = vmatpush.msra.mxu0 %v1037
    %1096 = vmatpush.msra.mxu0 %v1036
    %1097 = vmatpush.msra.mxu0 %v1035
    %1098 = vmatpush.msra.mxu0 %v1034
    %1099 = vmatpush.msra.mxu0 %v1033
    %1100 = vmatpush.msra.mxu0 %v1032
    %1101 = vmatpush.msra.mxu0 %v1031
    %1102 = vmatpush.msra.mxu0 %v1030
    %1103 = vmatpush.msra.mxu0 %v1029
    %1104 = vmatmul.f32.gmra.mxu0 %v1078
    %v1105 = vpop.f32.mrf.mxu0
    %v1106 = vadd.f32 %v1047, %v1105
    %1107 = vmatmul.f32.gmra.mxu0 %v1085
    %v1108 = vpop.f32.mrf.mxu0
    %v1109 = vadd.f32 %v1047, %v1108
    %1110 = vdwg.mxu0
    %v1111 = vmax.f32 %v1106, 0.0
    %v1112 = vmax.f32 %v1109, 0.0
    %v1113 = vld [vmem:[#allocation8] sm:$0xff]
    %v1114 = vld [vmem:[#allocation8 + $0x8] sm:$0xff]
    %v1115 = vld [vmem:[#allocation8 + $0x10] sm:$0xff]
    %v1116 = vld [vmem:[#allocation8 + $0x18] sm:$0xff]
    %v1117 = vld [vmem:[#allocation8 + $0x20] sm:$0xff]
    %v1118 = vld [vmem:[#allocation8 + $0x28] sm:$0xff]
    %v1119 = vld [vmem:[#allocation8 + $0x30] sm:$0xff]
    %v1120 = vld [vmem:[#allocation8 + $0x38] sm:$0xff]
    %v1121 = vld [vmem:[#allocation8 + $0x40] sm:$0xff]
    %v1122 = vld [vmem:[#allocation8 + $0x48] sm:$0xff]
    %v1123 = vld [vmem:[#allocation8 + $0x50] sm:$0xff]
    %v1124 = vld [vmem:[#allocation8 + $0x58] sm:$0xff]
    %v1125 = vld [vmem:[#allocation8 + $0x60] sm:$0xff]
    %v1126 = vld [vmem:[#allocation8 + $0x68] sm:$0xff]
    %v1127 = vld [vmem:[#allocation8 + $0x70] sm:$0xff]
    %v1128 = vld [vmem:[#allocation8 + $0x78] sm:$0xff]
    %v1129 = vld [vmem:[%s5] sm:$0x1]
    %v1131 = vperm.slane %v1129, 0
    %1133 = vmatpush.msra.mxu0 %v1128
    %1134 = vmatpush.msra.mxu0 %v1127
    %1135 = vmatpush.msra.mxu0 %v1126
    %1136 = vmatpush.msra.mxu0 %v1125
    %1137 = vmatpush.msra.mxu0 %v1124
    %1138 = vmatpush.msra.mxu0 %v1123
    %1139 = vmatpush.msra.mxu0 %v1122
    %1140 = vmatpush.msra.mxu0 %v1121
    %1141 = vmatpush.msra.mxu0 %v1120
    %1142 = vmatpush.msra.mxu0 %v1119
    %1143 = vmatpush.msra.mxu0 %v1118
    %1144 = vmatpush.msra.mxu0 %v1117
    %1145 = vmatpush.msra.mxu0 %v1116
    %1146 = vmatpush.msra.mxu0 %v1115
    %1147 = vmatpush.msra.mxu0 %v1114
    %1148 = vmatpush.msra.mxu0 %v1113
    %1149 = vmatmul.f32.gmra.mxu0 %v1111
    %v1150 = vpop.f32.mrf.mxu0
    %v1151 = vadd.f32 %v1131, %v1150
    %1152 = vmatmul.f32.gmra.mxu0 %v1112
    %v1153 = vpop.f32.mrf.mxu0
    %v1154 = vadd.f32 %v1131, %v1153
    %1155 = vdwg.mxu0
    %1156 = vst [vmem:[#allocation10] sm:$0xff] %v1151
    %1157 = vst [vmem:[#allocation10 + $0x8] sm:$0xff] %v1154
    // Predicated region
    $region42: #{tpu_custom_call.1} parent=1 // pred_check
      _
    $region43: #{tpu_custom_call.1} parent=1 // pred_check_branch
      %1159 = sbr.rel (0) target = $region45
    $region44: #{tpu_custom_call.1} parent=1 // pred_region
      %1161 = vsyncadd [#allocation4], 0
      %s1162 = sshll.u32 [#allocation10], 4
      %s1163 = int_to_ptr.vmem [resolvable:$true] %s1162
      %s1164 = sshll.u32 %s6, 4
      %s1165 = int_to_ptr.hbm [resolvable:$true] %s1164
      %1170 = dma.vmem_to_hbm [thread:$0]  %s1163, 256, %s1165, [#allocation4], 128, 128, 8
    $region45: #{tpu_custom_call.1} parent=1 // pred_fallthru
      _
    // Predicated region
    $region46: #{tpu_custom_call.1} parent=1 // pred_check
      _
    $region47: #{tpu_custom_call.1} parent=1 // pred_check_branch
      %1172 = sbr.rel (0) target = $region49
    $region48: #{tpu_custom_call.1} parent=1 // pred_region
      %1174 = dma.done [#allocation4], 256
    $region49: #{tpu_custom_call.1} parent=1 // pred_fallthru
      _
    %1175 = vsyncpa [#allocation3], 1
    %1176 = vsyncpa [#allocation6], 1
    %1177 = vsyncpa [#allocation9], 1
    %1178 = vsyncpa [#allocation4], 1

</llo_original>
